<compile_context>
chip_gen: v5e
topology: v5e:2x2
jax: 0.10.0
libtpu: 0.0.40
codegen_flags: <defaults>
</compile_context>

<pallas_src>
import math

import jax
import jax.numpy as jnp
from jax.experimental import pallas as pl
from jax.experimental.pallas import tpu as pltpu


_TARGET_TILE_BYTES = 4 << 20      # ~4 MiB per tile buffer
_MIN_TILE_BYTES = 512 << 10       # don't shrink tiles below this for megacore splitting
_VMEM_LIMIT_BYTES = 32 << 20      # in+out double-buffered 4 MiB tiles fit with headroom


def _round_up(x: int, m: int) -> int:
    return (x + m - 1) // m * m


def _cdiv(a: int, b: int) -> int:
    return (a + b - 1) // b


def _choose_view(F: int):
    """View a length-F per-sample feature vector as (rows_per_sample, Lw)."""
    if F % 128 == 0:
        for cand in (1024, 512, 256, 128):
            if F % cand == 0:
                return F // cand, cand
    # Not a multiple of 128: keep the whole sample on the lane axis; the last
    # lane block is ragged (masked stores) instead of padding through HBM.
    return 1, F


def _choose_tiles(R: int, Lw: int, itemsize: int, row_align: int,
                  target_tile_bytes: int):
    """Pick (tile_r, tile_l) for the (R, Lw) slab."""
    # Lane tile: full width if it fits the budget, else a large multiple of 128
    # (ragged tail block handled by Pallas masking).
    max_tile_elems = max(128, target_tile_bytes // itemsize)
    tile_l = Lw if Lw <= max_tile_elems else max(128, (max_tile_elems // 128) * 128)

    row_bytes = tile_l * itemsize
    max_tile_r = max(row_align, (target_tile_bytes // row_bytes) // row_align * row_align)

    num_tiles = _cdiv(R, max_tile_r)
    # Prefer >= 8 row tiles (v7x megacore sharding) as long as each tile stays
    # >= _MIN_TILE_BYTES; a no-op for small problems.
    num_tiles = max(num_tiles, min(8, max(1, (R * row_bytes) // _MIN_TILE_BYTES)))

    if num_tiles <= 1:
        return R, tile_l                       # single full-extent row tile (always legal)

    # Balance tile_r so the last row tile isn't mostly empty.
    tile_r = _round_up(_cdiv(R, num_tiles), row_align)
    if tile_r >= R:
        tile_r = R
    return tile_r, tile_l


def _drop_path_kernel(x_ref, s_ref, o_ref):
    """o = x * scale, scale broadcast along lanes.

    x_ref / o_ref : VMEM (tile_r, tile_l) block in the input dtype
    s_ref         : VMEM (tile_r, 1) float32 per-row scale (0.0 or 1/keep_prob)
    """
    x = x_ref[...].astype(jnp.float32)
    o_ref[...] = (x * s_ref[...]).astype(o_ref.dtype)


def drop_path(x, drop_prob: float = 0.0, training: bool = False, *, key=None,
              donate_x: bool = False, target_tile_bytes: int = _TARGET_TILE_BYTES):
    """Functional DropPath matching the PyTorch reference forward semantics."""
    if drop_prob == 0.0 or not training:
        return x
    if key is None:
        raise ValueError("drop_path in training mode needs a PRNG key")

    keep_prob = 1.0 - drop_prob
    B = x.shape[0]
    F = int(math.prod(x.shape[1:])) if x.ndim > 1 else 1
    itemsize = jnp.dtype(x.dtype).itemsize
    row_align = {4: 8, 2: 16, 1: 32}.get(itemsize, 8)

    rows_per_sample, Lw = _choose_view(F)
    R = B * rows_per_sample
    tile_r, tile_l = _choose_tiles(R, Lw, itemsize, row_align, target_tile_bytes)

    # Free contiguous reshape -- no data movement.
    x2d = x.reshape(R, Lw)

    # Per-sample scale: floor(keep_prob + U[0,1)) in {0,1}, divided by keep_prob.
    rand = jax.random.uniform(key, (B,), dtype=jnp.float32)
    scale = jnp.floor(keep_prob + rand) / keep_prob
    if rows_per_sample > 1:
        scale = jnp.repeat(scale, rows_per_sample)
    scale2d = scale.reshape(R, 1)

    grid = (_cdiv(R, tile_r), _cdiv(Lw, tile_l))

    out2d = pl.pallas_call(
        _drop_path_kernel,
        out_shape=jax.ShapeDtypeStruct((R, Lw), x.dtype),
        grid=grid,
        in_specs=[
            pl.BlockSpec((tile_r, tile_l), lambda i, j: (i, j)),
            pl.BlockSpec((tile_r, 1), lambda i, j: (i, 0)),
        ],
        out_specs=pl.BlockSpec((tile_r, tile_l), lambda i, j: (i, j)),
        compiler_params=pltpu.CompilerParams(
            dimension_semantics=("parallel", "parallel"),
            vmem_limit_bytes=_VMEM_LIMIT_BYTES,
        ),
        cost_estimate=pl.CostEstimate(
            flops=R * Lw,
            transcendentals=0,
            bytes_accessed=2 * R * Lw * itemsize + R * 4,
        ),
        # Only alias x's HBM buffer if the caller *really* donates x at the jit
        # boundary; otherwise XLA inserts a defensive copy (slower than the op).
        input_output_aliases=({0: 0} if donate_x else {}),
    )(x2d, scale2d)

    return out2d.reshape(x.shape)


class DropPath:
    """Drop paths (Stochastic Depth) per sample. No parameters (drop_prob only)."""

    def __init__(self, drop_prob=None):
        self.drop_prob = 0.0 if drop_prob is None else float(drop_prob)
        self.training = True

    def __call__(self, x, *, key=None):
        return drop_path(x, self.drop_prob, self.training, key=key)


if __name__ == "__main__":
    root = jax.random.PRNGKey(0)
    k_x, k_drop, k_x2, k_x3, k_x4 = jax.random.split(root, 5)

    drop_prob = 0.25
    keep_prob = 1.0 - drop_prob

    def ref(x, key):
        B = x.shape[0]
        rand = jax.random.uniform(key, (B,), dtype=jnp.float32)
        mask = jnp.floor(keep_prob + rand).reshape((B,) + (1,) * (x.ndim - 1))
        return (x.astype(jnp.float32) / keep_prob * mask).astype(x.dtype)

    # 1) lane-aligned feature size (C*H*W = 1024), fp32: row-slab path.
    x = jax.random.normal(k_x, (2, 4, 16, 16), dtype=jnp.float32)
    module = DropPath(drop_prob)
    module.training = True
    y = jax.block_until_ready(module(x, key=k_drop))
    assert y.shape == x.shape and y.dtype == x.dtype
    assert jnp.allclose(y, ref(x, k_drop), atol=1e-5, rtol=1e-5), "aligned-path mismatch"

    # 2) feature size NOT a multiple of 128 (3*14*14 = 588): no pad, no slice.
    x2 = jax.random.normal(k_x2, (2, 3, 14, 14), dtype=jnp.float32)
    y2 = jax.block_until_ready(drop_path(x2, drop_prob, True, key=k_drop))
    assert jnp.allclose(y2, ref(x2, k_drop), atol=1e-5, rtol=1e-5), "ragged-F mismatch"

    # 3) multi-row-tile grid with a ragged last row tile and blocks spanning
    #    several samples (tiny tile target just to exercise the tiling).
    x3 = jax.random.normal(k_x3, (5, 4, 32, 32), dtype=jnp.float32)
    y3 = jax.block_until_ready(
        drop_path(x3, drop_prob, True, key=k_drop, target_tile_bytes=64 * 1024))
    assert jnp.allclose(y3, ref(x3, k_drop), atol=1e-5, rtol=1e-5), "multi-tile mismatch"

    # 4) ragged lane tiling (F = 867, tile_l = 512 < F) in bf16.
    x4 = jax.random.normal(k_x4, (2, 3, 17, 17), dtype=jnp.bfloat16)
    y4 = jax.block_until_ready(
        drop_path(x4, drop_prob, True, key=k_drop, target_tile_bytes=1024))
    assert jnp.allclose(y4.astype(jnp.float32), ref(x4, k_drop).astype(jnp.float32),
                        atol=1e-2, rtol=1e-2), "ragged-lane bf16 mismatch"

    # 5) eval mode (or drop_prob == 0): identity, no kernel launch.
    module.training = False
    y_eval = jax.block_until_ready(module(x))
    assert jnp.array_equal(y_eval, x), "eval-mode should be identity"

    print("KERNEL_OK")
</pallas_src>

<mosaic_0001>
module attributes {stable_mosaic.version = 11 : i64} {
  func.func @_drop_path_kernel(%arg0: i32, %arg1: i32, %arg2: memref<2x1024xf32, #tpu.memory_space<vmem>>, %arg3: memref<2x1xf32, #tpu.memory_space<vmem>>, %arg4: memref<2x1024xf32, #tpu.memory_space<vmem>>) attributes {dimension_semantics = [#tpu.dimension_semantics<parallel>, #tpu.dimension_semantics<parallel>], iteration_bounds = array<i64: 1, 1>, scalar_prefetch = 0 : i64, scratch_operands = 0 : i64, tpu.core_type = #tpu.core_type<tc>, window_params = [{transform_indices = @transform_0, window_bounds = array<i64: 2, 1024>}, {transform_indices = @transform_1, window_bounds = array<i64: 2, 1>}, {transform_indices = @transform_2, window_bounds = array<i64: 2, 1024>}]} {
    %c0 = arith.constant 0 : index
    %c0_0 = arith.constant 0 : index
    %0 = vector.load %arg2[%c0, %c0_0] : memref<2x1024xf32, #tpu.memory_space<vmem>>, vector<2x1024xf32>
    %c0_1 = arith.constant 0 : index
    %c0_2 = arith.constant 0 : index
    %1 = vector.load %arg3[%c0_1, %c0_2] : memref<2x1xf32, #tpu.memory_space<vmem>>, vector<2x1xf32>
    %2 = vector.broadcast %1 : vector<2x1xf32> to vector<2x1024xf32>
    %3 = arith.mulf %0, %2 : vector<2x1024xf32>
    %c0_3 = arith.constant 0 : index
    %c0_4 = arith.constant 0 : index
    %4 = vector.load %arg4[%c0_3, %c0_4] : memref<2x1024xf32, #tpu.memory_space<vmem>>, vector<2x1024xf32>
    tpu.vector_store %arg4[%c0_3, %c0_4], %3 {strides = array<i32>} : memref<2x1024xf32, #tpu.memory_space<vmem>>, vector<2x1024xf32>,
    return
  }
  func.func @transform_0(%arg0: i32, %arg1: i32) -> (i32, i32) {
    %c0_i32 = arith.constant 0 : i32
    return %arg0, %arg1 : i32, i32
  }
  func.func @transform_1(%arg0: i32, %arg1: i32) -> (i32, i32) {
    %c0_i32 = arith.constant 0 : i32
    %c0_i32_0 = arith.constant 0 : i32
    return %arg0, %c0_i32 : i32, i32
  }
  func.func @transform_2(%arg0: i32, %arg1: i32) -> (i32, i32) {
    %c0_i32 = arith.constant 0 : i32
    return %arg0, %arg1 : i32, i32
  }
}

</mosaic_0001>

<llo_original>
// kernel: tpu_custom_call.1
$region0: #{tpu_custom_call.1}
  #allocation0 [shape = 'u32[]', space=smem, size = 0x4, offset = 0x4, fixed_abs, tag = 'smem constant byte address 0x4 - core index']
  #allocation1 [shape = 'u32[72,128]{1,0:T(1,128)}', space=vmem, size = 0x9000, scoped, tag = 'internal scratch']
  %s0 = inlined_call_operand.hbm [shape: f32[2,1024], index: 0, kind: input, shape index: {}]
  %s1 = inlined_call_operand.vmem [shape: f32[2,1], index: 1, kind: input, shape index: {}]
  %s2 = inlined_call_operand.hbm [shape: f32[2,1024], index: 2, kind: output, shape index: {}]
  %s3 = sld [smem:[#allocation0]]
  $region22: #{tpu_custom_call.1} parent=0
    _
  %s5 = ssub.s32 1, %s3
  %s6 = scalar_select 0, %s5, %s3
  $region1: #{tpu_custom_call.1} parent=0
    #allocation2 [shape = 'u8[8192]{0}', space=vmem, size = 0x2000, scoped, tag = 'input window, operand 0, single buffered']
    #allocation3 [shape = 's32[1]{0}', space=sflag, size = 0x4, scoped, tag = 'scoped memory for tpu_custom_call.1']
    #allocation4 [shape = 's32[1]{0}', space=sflag, size = 0x4, scoped, tag = 'scoped memory for tpu_custom_call.1']
    #allocation5 [shape = 'u8[8192]{0}', space=vmem, size = 0x2000, scoped, tag = 'output window, operand 0, single buffered']
    %7 = vsyncpa [#allocation3], 0
    %8 = vsyncpa [#allocation4], 0
    // Predicated region
    $region2: #{tpu_custom_call.1} parent=1 // pred_check
      _
    $region3: #{tpu_custom_call.1} parent=1 // pred_check_branch
      %10 = sbr.rel (0) target = $region5
    $region4: #{tpu_custom_call.1} parent=1 // pred_region
      %12 = vsyncadd [#allocation3], 0
      %s14 = sshll.u32 %s0, 4
      %s15 = int_to_ptr.hbm [resolvable:$true] %s14
      %s16 = sshll.u32 [#allocation2], 4
      %s17 = int_to_ptr.vmem [resolvable:$true] %s16
      %19 = dma.hbm_to_vmem [thread:$0]  %s15, 256, %s17, [#allocation3]
    $region5: #{tpu_custom_call.1} parent=1 // pred_fallthru
      _
    // Predicated region
    $region6: #{tpu_custom_call.1} parent=1 // pred_check
      _
    $region7: #{tpu_custom_call.1} parent=1 // pred_check_branch
      %21 = sbr.rel (0) target = $region9
    $region8: #{tpu_custom_call.1} parent=1 // pred_region
      _
    $region9: #{tpu_custom_call.1} parent=1 // pred_fallthru
      _
    // Predicated region
    $region10: #{tpu_custom_call.1} parent=1 // pred_check
      _
    $region11: #{tpu_custom_call.1} parent=1 // pred_check_branch
      %23 = sbr.rel (0) target = $region13
    $region12: #{tpu_custom_call.1} parent=1 // pred_region
      %25 = dma.done [#allocation3], 256
    $region13: #{tpu_custom_call.1} parent=1 // pred_fallthru
      _
    %v26 = vld [vmem:[#allocation2] sm:$0xff]
    %v27 = vld [vmem:[#allocation2 + $0x8] sm:$0xff]
    %v28 = vld [vmem:[%s1] sm:$0x3]
    %30 = vset.pattern.permute.xlu0 0
    %31 = vperm.xlu0 %30, %v28
    %v32 = vpop.permute.xlu0 %31
    %v34 = vunpack.c.l.s4 269488144
    %v35 = vunpack.c.0.s8 %v34
    %v36 = vperm.slane %v32, %v35
    %v38 = vmul.f32 %v26, %v36
    %v39 = vmul.f32 %v27, %v36
    %40 = vst [vmem:[#allocation5] sm:$0xff] %v38
    %41 = vst [vmem:[#allocation5 + $0x8] sm:$0xff] %v39
    // Predicated region
    $region14: #{tpu_custom_call.1} parent=1 // pred_check
      _
    $region15: #{tpu_custom_call.1} parent=1 // pred_check_branch
      %43 = sbr.rel (0) target = $region17
    $region16: #{tpu_custom_call.1} parent=1 // pred_region
      %45 = vsyncadd [#allocation4], 0
      %s47 = sshll.u32 [#allocation5], 4
      %s48 = int_to_ptr.vmem [resolvable:$true] %s47
      %s49 = sshll.u32 %s2, 4
      %s50 = int_to_ptr.hbm [resolvable:$true] %s49
      %52 = dma.vmem_to_hbm [thread:$0]  %s48, 256, %s50, [#allocation4]
    $region17: #{tpu_custom_call.1} parent=1 // pred_fallthru
      _
    // Predicated region
    $region18: #{tpu_custom_call.1} parent=1 // pred_check
      _
    $region19: #{tpu_custom_call.1} parent=1 // pred_check_branch
      %54 = sbr.rel (0) target = $region21
    $region20: #{tpu_custom_call.1} parent=1 // pred_region
      %56 = dma.done [#allocation4], 256
    $region21: #{tpu_custom_call.1} parent=1 // pred_fallthru
      _
    %57 = vsyncpa [#allocation3], 1
    %58 = vsyncpa [#allocation4], 1

</llo_original>
